<compile_context>
chip_gen: v6e
topology: v6e:2x2x1
jax: 0.10.0
libtpu: 0.0.40
codegen_flags: <defaults>
</compile_context>

<pallas_src>
import functools

import jax
import jax.numpy as jnp
from jax.experimental import pallas as pl
from jax.experimental.pallas import tpu as pltpu


# ----------------------------------------------------------------------------
# Fused SE kernel: adaptive-avg-pool + 1x1 conv + ReLU + 1x1 conv + sigmoid
# ----------------------------------------------------------------------------
def _se_kernel(hw_total, x_ref, w1_ref, b1_ref, w2_ref, b2_ref, o_ref, acc_ref):
    """One (batch, hw-tile) grid step.

    x_ref  : (C, hw_tile)  lane-dense spatial tile of one batch element (native dtype)
    w1_ref : (Cr, C)   fc1 weight with 1/(H*W) folded in
    b1_ref : (Cr, 1)
    w2_ref : (C, Cr)   fc2 weight
    b2_ref : (C, 1)
    o_ref  : (C, 1)    sigmoid attention weights for this batch element
    acc_ref: (C, 1)    f32 running spatial sum (VMEM scratch, persists over hw)
    """
    hw = pl.program_id(1)
    hw_tile = x_ref.shape[-1]

    @pl.when(hw == 0)
    def _():
        acc_ref[...] = jnp.zeros_like(acc_ref)

    xt = x_ref[...].astype(jnp.float32)                      # in-kernel cast (VPU)
    if hw_total % hw_tile != 0:                              # static: ragged last tile
        rem = hw_total - hw * hw_tile                        # > hw_tile except on last
        lane = jax.lax.broadcasted_iota(jnp.int32, xt.shape, 1)
        xt = jnp.where(lane < rem, xt, 0.0)                  # zero out-of-bounds lanes
    # Lane-axis reduce straight into a sublane-native (C, 1) accumulator.
    acc_ref[...] += jnp.sum(xt, axis=-1, keepdims=True)

    @pl.when(hw == pl.num_programs(1) - 1)
    def _():
        pooled = acc_ref[...]                                # (C, 1); 1/HW folded in w1
        h = jnp.dot(w1_ref[...], pooled,
                    preferred_element_type=jnp.float32) + b1_ref[...]   # (Cr, 1)
        h = jnp.maximum(h, 0.0)                              # ReLU
        s = jnp.dot(w2_ref[...], h,
                    preferred_element_type=jnp.float32) + b2_ref[...]   # (C, 1)
        o_ref[...] = jax.nn.sigmoid(s).astype(o_ref.dtype)


def _round_up(x, m):
    return (x + m - 1) // m * m


def se_weight_module(x, fc1_w, fc1_b, fc2_w, fc2_b, *,
                     tile_budget_bytes=4 * 1024 * 1024, max_hw_tile=None):
    """SEWeightModule.forward.  x: (B, C, H, W) -> (B, C, 1, 1)."""
    B, C, H, W = x.shape
    Cr = fc1_w.shape[0]
    HW = H * W

    # Lane tile sized from a per-buffer byte budget (the pipeline double-buffers
    # it), keeping VMEM use bounded on every TPU generation.
    itemsize = jnp.dtype(x.dtype).itemsize
    cap = max(128, (tile_budget_bytes // (itemsize * C)) // 128 * 128)
    if max_hw_tile is not None:
        cap = max(128, min(cap, max_hw_tile // 128 * 128))
    if HW <= cap:
        hw_tile, n_hw = HW, 1                 # single full-extent tile, no masking
    else:
        hw_tile, n_hw = cap, pl.cdiv(HW, cap)  # ragged last tile masked in-kernel

    x3 = x.reshape(B, C, HW)                  # free reshape; streamed in native dtype

    # 1x1 convs applied to a (B, C, 1, 1) tensor are plain Linear layers
    # (column-oriented here).  Fold the 1/(H*W) mean scale into fc1's weight.
    w1 = fc1_w.reshape(Cr, C).astype(jnp.float32) * (1.0 / HW)   # (Cr, C)
    b1 = fc1_b.reshape(Cr, 1).astype(jnp.float32)
    w2 = fc2_w.reshape(C, Cr).astype(jnp.float32)                # (C, Cr)
    b2 = fc2_b.reshape(C, 1).astype(jnp.float32)

    out = pl.pallas_call(
        functools.partial(_se_kernel, HW),
        out_shape=jax.ShapeDtypeStruct((B, C, 1), x.dtype),
        grid=(B, n_hw),
        in_specs=[
            pl.BlockSpec((None, C, hw_tile), lambda b, hw: (b, 0, hw)),
            pl.BlockSpec((Cr, C), lambda b, hw: (0, 0)),     # resident weights
            pl.BlockSpec((Cr, 1), lambda b, hw: (0, 0)),
            pl.BlockSpec((C, Cr), lambda b, hw: (0, 0)),
            pl.BlockSpec((C, 1), lambda b, hw: (0, 0)),
        ],
        out_specs=pl.BlockSpec((None, C, 1), lambda b, hw: (b, 0, 0)),
        scratch_shapes=[pltpu.VMEM((C, 1), jnp.float32)],
        compiler_params=pltpu.CompilerParams(
            dimension_semantics=("parallel", "arbitrary")),
    )(x3, w1, b1, w2, b2)

    return out.reshape(B, C, 1, 1)


# ----------------------------------------------------------------------------
# Pure-JAX reference (correctness check only)
# ----------------------------------------------------------------------------
def se_weight_ref(x, fc1_w, fc1_b, fc2_w, fc2_b):
    B, C, H, W = x.shape
    Cr = fc1_w.shape[0]
    pooled = jnp.mean(x.astype(jnp.float32), axis=(2, 3))        # (B, C)
    h = jnp.maximum(pooled @ fc1_w.reshape(Cr, C).T.astype(jnp.float32)
                    + fc1_b.astype(jnp.float32), 0.0)
    s = jax.nn.sigmoid(h @ fc2_w.reshape(C, Cr).T.astype(jnp.float32)
                       + fc2_b.astype(jnp.float32))
    return s.reshape(B, C, 1, 1).astype(x.dtype)


if __name__ == "__main__":
    key = jax.random.PRNGKey(0)
    kx, k1, k2, k3, k4, kx2 = jax.random.split(key, 6)

    # Primary config: channels must be >= reduction so channels // 6 > 0.
    batch, channels, height, width = 2, 48, 16, 16
    reduction = 6
    cr = channels // reduction

    x = jax.random.normal(kx, (batch, channels, height, width), jnp.float32)
    # Conv2d(C, C//r, 1) / Conv2d(C//r, C, 1) parameter shapes, PyTorch layout.
    fc1_w = 0.1 * jax.random.normal(k1, (cr, channels, 1, 1), jnp.float32)
    fc1_b = 0.1 * jax.random.normal(k2, (cr,), jnp.float32)
    fc2_w = 0.1 * jax.random.normal(k3, (channels, cr, 1, 1), jnp.float32)
    fc2_b = 0.1 * jax.random.normal(k4, (channels,), jnp.float32)

    out = jax.block_until_ready(se_weight_module(x, fc1_w, fc1_b, fc2_w, fc2_b))
    assert out.shape == (batch, channels, 1, 1) and out.dtype == x.dtype
    ref = se_weight_ref(x, fc1_w, fc1_b, fc2_w, fc2_b)
    assert jnp.allclose(out, ref, rtol=1e-4, atol=1e-4), \
        float(jnp.max(jnp.abs(out - ref)))

    # Second small config exercising the multi-tile + ragged-last-tile mask
    # path (HW = 144 with a forced 128-lane tile -> last tile has 16 valid lanes).
    c2, r2 = 16, 6
    cr2 = c2 // r2
    x2 = jax.random.normal(kx2, (1, c2, 12, 12), jnp.float32)
    w1_2 = 0.1 * jax.random.normal(k1, (cr2, c2, 1, 1), jnp.float32)
    b1_2 = 0.1 * jax.random.normal(k2, (cr2,), jnp.float32)
    w2_2 = 0.1 * jax.random.normal(k3, (c2, cr2, 1, 1), jnp.float32)
    b2_2 = 0.1 * jax.random.normal(k4, (c2,), jnp.float32)
    out2 = jax.block_until_ready(
        se_weight_module(x2, w1_2, b1_2, w2_2, b2_2, max_hw_tile=128))
    ref2 = se_weight_ref(x2, w1_2, b1_2, w2_2, b2_2)
    assert jnp.allclose(out2, ref2, rtol=1e-4, atol=1e-4), \
        float(jnp.max(jnp.abs(out2 - ref2)))

    print("KERNEL_OK")
</pallas_src>

<mosaic_0001>
module attributes {stable_mosaic.version = 11 : i64} {
  func.func @_se_kernel(%arg0: i32, %arg1: i32, %arg2: memref<1x48x256xf32, #tpu.memory_space<vmem>>, %arg3: memref<8x48xf32, #tpu.memory_space<vmem>>, %arg4: memref<8x1xf32, #tpu.memory_space<vmem>>, %arg5: memref<48x8xf32, #tpu.memory_space<vmem>>, %arg6: memref<48x1xf32, #tpu.memory_space<vmem>>, %arg7: memref<1x48x1xf32, #tpu.memory_space<vmem>>, %arg8: memref<48x1xf32, #tpu.memory_space<vmem>>) attributes {dimension_semantics = [#tpu.dimension_semantics<parallel>, #tpu.dimension_semantics<arbitrary>], iteration_bounds = array<i64: 2, 1>, scalar_prefetch = 0 : i64, scratch_operands = 1 : i64, tpu.core_type = #tpu.core_type<tc>, window_params = [{transform_indices = @transform_0, window_bounds = array<i64: 1, 48, 256>}, {pipeline_mode = #tpu.pipeline_mode<synchronous>, transform_indices = @transform_1, window_bounds = array<i64: 8, 48>}, {pipeline_mode = #tpu.pipeline_mode<synchronous>, transform_indices = @transform_2, window_bounds = array<i64: 8, 1>}, {pipeline_mode = #tpu.pipeline_mode<synchronous>, transform_indices = @transform_3, window_bounds = array<i64: 48, 8>}, {pipeline_mode = #tpu.pipeline_mode<synchronous>, transform_indices = @transform_4, window_bounds = array<i64: 48, 1>}, {transform_indices = @transform_5, window_bounds = array<i64: 1, 48, 1>}]} {
    %c0_i32 = arith.constant 0 : i32
    %0 = arith.cmpi eq, %arg1, %c0_i32 : i32
    %1 = arith.extui %0 : i1 to i32
    %c0_i32_0 = arith.constant 0 : i32
    %2 = arith.cmpi ne, %1, %c0_i32_0 : i32
    scf.if %2 {
      %cst_9 = arith.constant 0.000000e+00 : f32
      %13 = vector.broadcast %cst_9 : f32 to vector<48x1xf32>
      %c0_10 = arith.constant 0 : index
      %c0_11 = arith.constant 0 : index
      %14 = vector.load %arg8[%c0_10, %c0_11] : memref<48x1xf32, #tpu.memory_space<vmem>>, vector<48x1xf32>
      tpu.vector_store %arg8[%c0_10, %c0_11], %13 {strides = array<i32>} : memref<48x1xf32, #tpu.memory_space<vmem>>, vector<48x1xf32>,
    } else {
    }
    %c0 = arith.constant 0 : index
    %c0_1 = arith.constant 0 : index
    %c0_2 = arith.constant 0 : index
    %3 = vector.load %arg2[%c0, %c0_1, %c0_2] : memref<1x48x256xf32, #tpu.memory_space<vmem>>, vector<1x48x256xf32>
    %4 = vector.shape_cast %3 : vector<1x48x256xf32> to vector<48x256xf32>
    %c0_3 = arith.constant 0 : index
    %c0_4 = arith.constant 0 : index
    %5 = vector.load %arg8[%c0_3, %c0_4] : memref<48x1xf32, #tpu.memory_space<vmem>>, vector<48x1xf32>
    %cst = arith.constant dense<0.000000e+00> : vector<48xf32>
    %6 = vector.multi_reduction <add>, %4, %cst [1] : vector<48x256xf32> to vector<48xf32>
    %7 = vector.shape_cast %6 : vector<48xf32> to vector<48x1xf32>
    %8 = arith.addf %5, %7 : vector<48x1xf32>
    %c0_5 = arith.constant 0 : index
    %c0_6 = arith.constant 0 : index
    %9 = vector.load %arg8[%c0_5, %c0_6] : memref<48x1xf32, #tpu.memory_space<vmem>>, vector<48x1xf32>
    tpu.vector_store %arg8[%c0_5, %c0_6], %8 {strides = array<i32>} : memref<48x1xf32, #tpu.memory_space<vmem>>, vector<48x1xf32>,
    %c0_i32_7 = arith.constant 0 : i32
    %10 = arith.cmpi eq, %arg1, %c0_i32_7 : i32
    %11 = arith.extui %10 : i1 to i32
    %c0_i32_8 = arith.constant 0 : i32
    %12 = arith.cmpi ne, %11, %c0_i32_8 : i32
    scf.if %12 {
      %c0_9 = arith.constant 0 : index
      %c0_10 = arith.constant 0 : index
      %13 = vector.load %arg8[%c0_9, %c0_10] : memref<48x1xf32, #tpu.memory_space<vmem>>, vector<48x1xf32>
      %c0_11 = arith.constant 0 : index
      %c0_12 = arith.constant 0 : index
      %14 = vector.load %arg3[%c0_11, %c0_12] : memref<8x48xf32, #tpu.memory_space<vmem>>, vector<8x48xf32>
      %cst_13 = arith.constant dense<0.000000e+00> : vector<8x1xf32>
      %15 = tpu.matmul %14, %13, %cst_13 {dimension_numbers = #tpu.dot_dimension_numbers<[1], [0], [0], [1], [0, 0, 1, 1], [], []>} : vector<8x48xf32>, vector<48x1xf32>, vector<8x1xf32> -> vector<8x1xf32>
      %c0_14 = arith.constant 0 : index
      %c0_15 = arith.constant 0 : index
      %16 = vector.load %arg4[%c0_14, %c0_15] : memref<8x1xf32, #tpu.memory_space<vmem>>, vector<8x1xf32>
      %17 = arith.addf %15, %16 : vector<8x1xf32>
      %cst_16 = arith.constant 0.000000e+00 : f32
      %18 = vector.broadcast %cst_16 : f32 to vector<8x1xf32>
      %19 = arith.maximumf %17, %18 : vector<8x1xf32>
      %c0_17 = arith.constant 0 : index
      %c0_18 = arith.constant 0 : index
      %20 = vector.load %arg5[%c0_17, %c0_18] : memref<48x8xf32, #tpu.memory_space<vmem>>, vector<48x8xf32>
      %cst_19 = arith.constant dense<0.000000e+00> : vector<48x1xf32>
      %21 = tpu.matmul %20, %19, %cst_19 {dimension_numbers = #tpu.dot_dimension_numbers<[1], [0], [0], [1], [0, 0, 1, 1], [], []>} : vector<48x8xf32>, vector<8x1xf32>, vector<48x1xf32> -> vector<48x1xf32>
      %c0_20 = arith.constant 0 : index
      %c0_21 = arith.constant 0 : index
      %22 = vector.load %arg6[%c0_20, %c0_21] : memref<48x1xf32, #tpu.memory_space<vmem>>, vector<48x1xf32>
      %23 = arith.addf %21, %22 : vector<48x1xf32>
      %24 = arith.negf %23 : vector<48x1xf32>
      %25 = math.exp %24 : vector<48x1xf32>
      %cst_22 = arith.constant 1.000000e+00 : f32
      %26 = vector.broadcast %cst_22 : f32 to vector<48x1xf32>
      %27 = arith.addf %26, %25 : vector<48x1xf32>
      %28 = arith.divf %26, %27 : vector<48x1xf32>
      %c0_23 = arith.constant 0 : index
      %c0_24 = arith.constant 0 : index
      %c0_25 = arith.constant 0 : index
      %29 = vector.load %arg7[%c0_23, %c0_24, %c0_25] : memref<1x48x1xf32, #tpu.memory_space<vmem>>, vector<1x48x1xf32>
      %30 = vector.shape_cast %29 : vector<1x48x1xf32> to vector<48x1xf32>
      %31 = vector.shape_cast %28 : vector<48x1xf32> to vector<1x48x1xf32>
      tpu.vector_store %arg7[%c0_23, %c0_24, %c0_25], %31 {strides = array<i32>} : memref<1x48x1xf32, #tpu.memory_space<vmem>>, vector<1x48x1xf32>,
    } else {
    }
    return
  }
  func.func @transform_0(%arg0: i32, %arg1: i32) -> (i32, i32, i32) {
    %c0_i32 = arith.constant 0 : i32
    %c0_i32_0 = arith.constant 0 : i32
    return %arg0, %c0_i32, %arg1 : i32, i32, i32
  }
  func.func @transform_1(%arg0: i32, %arg1: i32) -> (i32, i32) {
    %c0_i32 = arith.constant 0 : i32
    %c0_i32_0 = arith.constant 0 : i32
    %c0_i32_1 = arith.constant 0 : i32
    return %c0_i32, %c0_i32_0 : i32, i32
  }
  func.func @transform_2(%arg0: i32, %arg1: i32) -> (i32, i32) {
    %c0_i32 = arith.constant 0 : i32
    %c0_i32_0 = arith.constant 0 : i32
    %c0_i32_1 = arith.constant 0 : i32
    return %c0_i32, %c0_i32_0 : i32, i32
  }
  func.func @transform_3(%arg0: i32, %arg1: i32) -> (i32, i32) {
    %c0_i32 = arith.constant 0 : i32
    %c0_i32_0 = arith.constant 0 : i32
    %c0_i32_1 = arith.constant 0 : i32
    return %c0_i32, %c0_i32_0 : i32, i32
  }
  func.func @transform_4(%arg0: i32, %arg1: i32) -> (i32, i32) {
    %c0_i32 = arith.constant 0 : i32
    %c0_i32_0 = arith.constant 0 : i32
    %c0_i32_1 = arith.constant 0 : i32
    return %c0_i32, %c0_i32_0 : i32, i32
  }
  func.func @transform_5(%arg0: i32, %arg1: i32) -> (i32, i32, i32) {
    %c0_i32 = arith.constant 0 : i32
    %c0_i32_0 = arith.constant 0 : i32
    %c0_i32_1 = arith.constant 0 : i32
    return %arg0, %c0_i32, %c0_i32_0 : i32, i32, i32
  }
}

</mosaic_0001>

<llo_original>
// kernel: tpu_custom_call.1
$region0: #{tpu_custom_call.1}
  #allocation0 [shape = 'u32[]', space=smem, size = 0x4, offset = 0x4, fixed_abs, tag = 'smem constant byte address 0x4 - core index']
  #allocation1 [shape = 'u32[144,128]{1,0:T(1,128)}', space=vmem, size = 0x12000, scoped, tag = 'internal scratch']
  #allocation2 [shape = 'f32[48,1]{1,0:T(8,128)}', space=vmem, size = 0x6000, scoped, tag = 'scratch operand']
  %s0 = inlined_call_operand.hbm [shape: f32[2,48,256], index: 0, kind: input, shape index: {}]
  %s1 = inlined_call_operand.vmem [shape: f32[8,48], index: 1, kind: input, shape index: {}]
  %s2 = inlined_call_operand.vmem [shape: f32[8,1], index: 2, kind: input, shape index: {}]
  %s3 = inlined_call_operand.vmem [shape: f32[48,8], index: 3, kind: input, shape index: {}]
  %s4 = inlined_call_operand.vmem [shape: f32[48,1], index: 4, kind: input, shape index: {}]
  %s5 = inlined_call_operand.vmem [shape: f32[2,48,1], index: 5, kind: output, shape index: {}]
  %s6 = sld [smem:[#allocation0]]
  $region65: #{tpu_custom_call.1} parent=0
    _
  %s8 = ssub.s32 1, %s6
  %s9 = scalar_select 0, %s8, %s6
  $region1: #{tpu_custom_call.1} parent=0
    #allocation3 [shape = 'u8[98304]{0}', space=vmem, size = 0x18000, scoped, tag = 'input window, operand 0']
    #allocation4 [shape = 's32[2]{0}', space=sflag, size = 0x8, scoped, tag = 'scoped memory for tpu_custom_call.1']
    %10 = vsyncpa [#allocation4], 0
    %s11 = scalar_lea.sflag [#allocation4], 1
    %12 = vsyncpa %s11, 0
    loop: start=0, step=1, limit=4
    $region2: #{tpu_custom_call.1} parent=1 // loop_pre_header
      _
    $region3: #{tpu_custom_call.1} parent=1 // loop_header
      %s14 = sphi 0, %s18
      %p15 = scmp.ge.s32.totalorder %s14, 4
      %s21 = sphi 0, %s33
      %s22 = sphi 0, %s29
      %s23 = sphi 0, %s21
      %s24 = sphi 0, %s22
      %s25 = sphi 0, %s23
      %s26 = sphi 0, %s24
      %s38 = sphi 0, %s40
      %s41 = sphi 0, %s38
      %s42 = sphi 0, %s41
      %s58 = sphi 0, %s42
      %s62 = sphi 0, %s62
      %s64 = sphi 0, %s62
      %s65 = sphi 0, %s64
      %s79 = sphi 0, %s65
      %s83 = sphi 0, %s83
      %s85 = sphi 0, %s83
      %s86 = sphi 0, %s85
      %s100 = sphi 0, %s86
      %s104 = sphi 0, %s104
      %s106 = sphi 0, %s104
      %s107 = sphi 0, %s106
      %s121 = sphi 0, %s107
      %s125 = sphi 0, %s125
      %s127 = sphi 0, %s125
      %s128 = sphi 0, %s127
      %s142 = sphi 0, %s128
      %s148 = sphi 0, %s150
      %s151 = sphi 0, %s148
      %s152 = sphi 0, %s151
      %s168 = sphi 0, %s152
    $region4: #{tpu_custom_call.1} parent=1 // loop_header_branch
      %17 = sbr.rel (%p15) target = $region8
    $region5: #{tpu_custom_call.1} parent=1 // loop_body
      %s19 = ssub.s32 %s14, 1
      %s20 = ssub.s32 %s14, 2
      %s27 = sadd.s32 1, %s22
      %p28 = scmp.ge.s32.totalorder %s27, 1
      %s29 = scalar_select %p28, 0, %s27
      %s30 = sadd.s32 1, %s21
      %s31 = scalar_select %p28, %s30, %s21
      %p32 = scmp.ge.s32.totalorder %s31, 2
      %s33 = scalar_select %p32, 0, %s31
      %s34 = ssub.s32 %s21, %s33
      %s35 = ssub.s32 %s22, %s29
      %s36 = sor.u32 %s34, %s35
      %p37 = scmp.eq.s32.totalorder %s36, 0
      %s39 = sadd.s32 %s38, 1
      %s40 = scalar_select %p37, %s38, %s39
      %p43 = pneg %p37
      %p44 = scmp.eq.s32.totalorder %s14, 1
      %p45 = por %p43, %p44
      %p46 = scmp.ne.s32.totalorder %s38, %s41
      %p47 = scmp.eq.s32.totalorder %s14, 0
      %p48 = por %p46, %p47
      %p49 = scmp.ne.s32.totalorder %s38, %s41
      %p50 = scmp.eq.s32.totalorder %s19, 1
      %p51 = por %p49, %p50
      %p52 = scmp.ne.s32.totalorder %s41, %s42
      %p53 = scmp.eq.s32.totalorder %s19, 0
      %p54 = por %p52, %p53
      %p55 = scmp.ne.s32.totalorder %s41, %s42
      %p56 = scmp.eq.s32.totalorder %s20, 1
      %p57 = por %p55, %p56
      %p59 = scmp.ne.s32.totalorder %s42, %s58
      %p60 = scmp.eq.s32.totalorder %s20, 0
      %p61 = por %p59, %p60
      %s63 = sadd.s32 %s62, 1
      %p66 = scmp.eq.s32.totalorder %s14, 1
      %p67 = scmp.ne.s32.totalorder %s62, %s64
      %p68 = scmp.eq.s32.totalorder %s14, 0
      %p69 = por %p67, %p68
      %p70 = scmp.ne.s32.totalorder %s62, %s64
      %p71 = scmp.eq.s32.totalorder %s19, 1
      %p72 = por %p70, %p71
      %p73 = scmp.ne.s32.totalorder %s64, %s65
      %p74 = scmp.eq.s32.totalorder %s19, 0
      %p75 = por %p73, %p74
      %p76 = scmp.ne.s32.totalorder %s64, %s65
      %p77 = scmp.eq.s32.totalorder %s20, 1
      %p78 = por %p76, %p77
      %p80 = scmp.ne.s32.totalorder %s65, %s79
      %p81 = scmp.eq.s32.totalorder %s20, 0
      %p82 = por %p80, %p81
      %s84 = sadd.s32 %s83, 1
      %p87 = scmp.eq.s32.totalorder %s14, 1
      %p88 = scmp.ne.s32.totalorder %s83, %s85
      %p89 = scmp.eq.s32.totalorder %s14, 0
      %p90 = por %p88, %p89
      %p91 = scmp.ne.s32.totalorder %s83, %s85
      %p92 = scmp.eq.s32.totalorder %s19, 1
      %p93 = por %p91, %p92
      %p94 = scmp.ne.s32.totalorder %s85, %s86
      %p95 = scmp.eq.s32.totalorder %s19, 0
      %p96 = por %p94, %p95
      %p97 = scmp.ne.s32.totalorder %s85, %s86
      %p98 = scmp.eq.s32.totalorder %s20, 1
      %p99 = por %p97, %p98
      %p101 = scmp.ne.s32.totalorder %s86, %s100
      %p102 = scmp.eq.s32.totalorder %s20, 0
      %p103 = por %p101, %p102
      %s105 = sadd.s32 %s104, 1
      %p108 = scmp.eq.s32.totalorder %s14, 1
      %p109 = scmp.ne.s32.totalorder %s104, %s106
      %p110 = scmp.eq.s32.totalorder %s14, 0
      %p111 = por %p109, %p110
      %p112 = scmp.ne.s32.totalorder %s104, %s106
      %p113 = scmp.eq.s32.totalorder %s19, 1
      %p114 = por %p112, %p113
      %p115 = scmp.ne.s32.totalorder %s106, %s107
      %p116 = scmp.eq.s32.totalorder %s19, 0
      %p117 = por %p115, %p116
      %p118 = scmp.ne.s32.totalorder %s106, %s107
      %p119 = scmp.eq.s32.totalorder %s20, 1
      %p120 = por %p118, %p119
      %p122 = scmp.ne.s32.totalorder %s107, %s121
      %p123 = scmp.eq.s32.totalorder %s20, 0
      %p124 = por %p122, %p123
      %s126 = sadd.s32 %s125, 1
      %p129 = scmp.eq.s32.totalorder %s14, 1
      %p130 = scmp.ne.s32.totalorder %s125, %s127
      %p131 = scmp.eq.s32.totalorder %s14, 0
      %p132 = por %p130, %p131
      %p133 = scmp.ne.s32.totalorder %s125, %s127
      %p134 = scmp.eq.s32.totalorder %s19, 1
      %p135 = por %p133, %p134
      %p136 = scmp.ne.s32.totalorder %s127, %s128
      %p137 = scmp.eq.s32.totalorder %s19, 0
      %p138 = por %p136, %p137
      %p139 = scmp.ne.s32.totalorder %s127, %s128
      %p140 = scmp.eq.s32.totalorder %s20, 1
      %p141 = por %p139, %p140
      %p143 = scmp.ne.s32.totalorder %s128, %s142
      %p144 = scmp.eq.s32.totalorder %s20, 0
      %p145 = por %p143, %p144
      %s146 = ssub.s32 %s21, %s33
      %p147 = scmp.eq.s32.totalorder %s146, 0
      %s149 = sadd.s32 %s148, 1
      %s150 = scalar_select %p147, %s148, %s149
      %p153 = pneg %p147
      %p154 = scmp.eq.s32.totalorder %s14, 1
      %p155 = por %p153, %p154
      %p156 = scmp.ne.s32.totalorder %s148, %s151
      %p157 = scmp.eq.s32.totalorder %s14, 0
      %p158 = por %p156, %p157
      %p159 = scmp.ne.s32.totalorder %s148, %s151
      %p160 = scmp.eq.s32.totalorder %s19, 1
      %p161 = por %p159, %p160
      %p162 = scmp.ne.s32.totalorder %s151, %s152
      %p163 = scmp.eq.s32.totalorder %s19, 0
      %p164 = por %p162, %p163
      %p165 = scmp.ne.s32.totalorder %s151, %s152
      %p166 = scmp.eq.s32.totalorder %s20, 1
      %p167 = por %p165, %p166
      %p169 = scmp.ne.s32.totalorder %s152, %s168
      %p170 = scmp.eq.s32.totalorder %s20, 0
      %p171 = por %p169, %p170
      %p172 = scmp.le.s32.totalorder 1, %s14
      %p173 = scmp.lt.s32.totalorder %s14, 3
      %p174 = pnand %p172, %p173
      %p175 = pneg %p174
      // Predicated region
      $region9: #{tpu_custom_call.1} parent=5 // pred_check
        _
      $region10: #{tpu_custom_call.1} parent=5 // pred_check_branch
        %177 = sbr.rel (%p174) target = $region12
      $region11: #{tpu_custom_call.1} parent=5 // pred_region
        %s178 = ssub.s32 %s14, 1
        // Predicated region
        $region13: #{tpu_custom_call.1} parent=11 // pred_check
          %p179 = pneg %p75
        $region14: #{tpu_custom_call.1} parent=11 // pred_check_branch
          %181 = sbr.rel (%p179) target = $region16
        $region15: #{tpu_custom_call.1} parent=11 // pred_region
          _
        $region16: #{tpu_custom_call.1} parent=11 // pred_fallthru
          _
        // Predicated region
        $region17: #{tpu_custom_call.1} parent=11 // pred_check
          %p182 = pneg %p96
        $region18: #{tpu_custom_call.1} parent=11 // pred_check_branch
          %184 = sbr.rel (%p182) target = $region20
        $region19: #{tpu_custom_call.1} parent=11 // pred_region
          _
        $region20: #{tpu_custom_call.1} parent=11 // pred_fallthru
          _
        // Predicated region
        $region21: #{tpu_custom_call.1} parent=11 // pred_check
          %p185 = pneg %p117
        $region22: #{tpu_custom_call.1} parent=11 // pred_check_branch
          %187 = sbr.rel (%p185) target = $region24
        $region23: #{tpu_custom_call.1} parent=11 // pred_region
          _
        $region24: #{tpu_custom_call.1} parent=11 // pred_fallthru
          _
        // Predicated region
        $region25: #{tpu_custom_call.1} parent=11 // pred_check
          %p188 = pneg %p138
        $region26: #{tpu_custom_call.1} parent=11 // pred_check_branch
          %190 = sbr.rel (%p188) target = $region28
        $region27: #{tpu_custom_call.1} parent=11 // pred_region
          _
        $region28: #{tpu_custom_call.1} parent=11 // pred_fallthru
          _
      $region12: #{tpu_custom_call.1} parent=5 // pred_fallthru
        _
      %p191 = scmp.lt.s32.totalorder %s14, 2
      // Predicated region
      $region29: #{tpu_custom_call.1} parent=5 // pred_check
        %p192 = pneg %p191
      $region30: #{tpu_custom_call.1} parent=5 // pred_check_branch
        %194 = sbr.rel (%p192) target = $region32
      $region31: #{tpu_custom_call.1} parent=5 // pred_region
        // Predicated region
        $region33: #{tpu_custom_call.1} parent=31 // pred_check
          %p195 = pneg %p48
        $region34: #{tpu_custom_call.1} parent=31 // pred_check_branch
          %197 = sbr.rel (%p195) target = $region36
        $region35: #{tpu_custom_call.1} parent=31 // pred_region
          %s198 = sand.u32 %s38, 1
          %s199 = scalar_lea.sflag [#allocation4], %s198
          %s200 = sand.u32 %s38, 1
          %s201 = smul.addr %s200, 96
          %s202 = scalar_lea.vmem [#allocation3], %s201
          %s203 = smul.u32 2, %s22
          %s205 = ssub.s32 1536, 1536
          %206 = vsyncadd %s199, %s205
          %s207 = smul.addr %s21, 12
          %s208 = sadd.s32 %s203, %s207
          %s209 = smul.addr %s208, 128
          %s210 = scalar_lea.hbm %s0, %s209
          %s211 = sshll.u32 %s202, 4
          %s212 = int_to_ptr.vmem [resolvable:$true] %s211
          %217 = dma.hbm_to_vmem [thread:$0]  %s210, 1536, %s212, %s199, 256, 256, 16
        $region36: #{tpu_custom_call.1} parent=31 // pred_fallthru
          _
      $region32: #{tpu_custom_call.1} parent=5 // pred_fallthru
        _
      %p218 = scmp.le.s32.totalorder 1, %s14
      %p219 = scmp.lt.s32.totalorder %s14, 3
      %p220 = pnand %p218, %p219
      %p221 = pneg %p220
      // Predicated region
      $region37: #{tpu_custom_call.1} parent=5 // pred_check
        _
      $region38: #{tpu_custom_call.1} parent=5 // pred_check_branch
        %223 = sbr.rel (%p220) target = $region40
      $region39: #{tpu_custom_call.1} parent=5 // pred_region
        %s224 = ssub.s32 %s14, 1
        %s225 = sand.u32 %s41, 1
        %s226 = scalar_lea.sflag [#allocation4], %s225
        %s227 = sand.u32 %s41, 1
        %s228 = smul.addr %s227, 96
        %s229 = scalar_lea.vmem [#allocation3], %s228
        // Predicated region
        $region41: #{tpu_custom_call.1} parent=39 // pred_check
          %p230 = pneg %p54
        $region42: #{tpu_custom_call.1} parent=39 // pred_check_branch
          %232 = sbr.rel (%p230) target = $region44
        $region43: #{tpu_custom_call.1} parent=39 // pred_region
          %233 = dma.done %s226, 1536
        $region44: #{tpu_custom_call.1} parent=39 // pred_fallthru
          _
        %s234 = sand.u32 %s41, 1
        %s235 = scalar_lea.sflag [#allocation4], %s234
        %s236 = sand.u32 %s41, 1
        %s237 = smul.addr %s236, 96
        %s238 = scalar_lea.vmem [#allocation3], %s237
        %p239 = pneg %p54
        %p240 = pneg %p51
        %p241 = pneg %p75
        %p242 = pneg %p72
        %p243 = pneg %p96
        %p244 = pneg %p93
        %p245 = pneg %p117
        %p246 = pneg %p114
        %p247 = pneg %p138
        %p248 = pneg %p135
        %p249 = pneg %p164
        %p250 = pneg %p161
        %p251 = scmp.lt.s32.totalorder %s23, 1
        %s252 = scalar_select %p251, %s23, 1
        %s253 = smul.addr %s252, 6
        %s254 = smul.addr %s253, 8
        %s255 = scalar_lea.vmem %s5, %s254
        %s256 = smul.u32 2, %s24
        %p257 = scmp.lt.s32.totalorder %s23, 1
        %s258 = scalar_select %p257, %s23, 1
        %s259 = smul.addr %s258, 6
        %s260 = smul.addr %s259, 8
        %s261 = scalar_lea.vmem %s5, %s260
        %p262 = scmp.eq.s32.totalorder %s24, 0
        // Predicated region
        $region45: #{tpu_custom_call.1} parent=39 // pred_check
          %p263 = pneg %p262
        $region46: #{tpu_custom_call.1} parent=39 // pred_check_branch
          %265 = sbr.rel (%p263) target = $region48
        $region47: #{tpu_custom_call.1} parent=39 // pred_region
          %vm266 = vcmask 7168
          %267 = vst.msk [vmem:[#allocation2] sm:$0xff] %vm266, 0.0
          %268 = vst.msk [vmem:[#allocation2 + $0x8] sm:$0xff] %vm266, 0.0
          %269 = vst.msk [vmem:[#allocation2 + $0x10] sm:$0xff] %vm266, 0.0
          %270 = vst.msk [vmem:[#allocation2 + $0x18] sm:$0xff] %vm266, 0.0
          %271 = vst.msk [vmem:[#allocation2 + $0x20] sm:$0xff] %vm266, 0.0
          %272 = vst.msk [vmem:[#allocation2 + $0x28] sm:$0xff] %vm266, 0.0
        $region48: #{tpu_custom_call.1} parent=39 // pred_fallthru
          _
        %v273 = vld [vmem:[%s229] sm:$0xff]
        %v274 = vld [vmem:[%s229 + $0x8] sm:$0xff]
        %v275 = vld [vmem:[%s229 + $0x10] sm:$0xff]
        %v276 = vld [vmem:[%s229 + $0x18] sm:$0xff]
        %v277 = vld [vmem:[%s229 + $0x20] sm:$0xff]
        %v278 = vld [vmem:[%s229 + $0x28] sm:$0xff]
        %v279 = vld [vmem:[%s229 + $0x30] sm:$0xff]
        %v280 = vld [vmem:[%s229 + $0x38] sm:$0xff]
        %v281 = vld [vmem:[%s229 + $0x40] sm:$0xff]
        %v282 = vld [vmem:[%s229 + $0x48] sm:$0xff]
        %v283 = vld [vmem:[%s229 + $0x50] sm:$0xff]
        %v284 = vld [vmem:[%s229 + $0x58] sm:$0xff]
        %v285 = vld [vmem:[#allocation2] sm:$0xff]
        %v286 = vld [vmem:[#allocation2 + $0x8] sm:$0xff]
        %v287 = vld [vmem:[#allocation2 + $0x10] sm:$0xff]
        %v288 = vld [vmem:[#allocation2 + $0x18] sm:$0xff]
        %v289 = vld [vmem:[#allocation2 + $0x20] sm:$0xff]
        %v290 = vld [vmem:[#allocation2 + $0x28] sm:$0xff]
        %v291 = vadd.f32 %v273, %v274
        %292 = vadd.xlane.f32.xlu0 %v291
        %v293 = vpop.xlane.xlu0 %292
        %v294 = vadd.f32 %v275, %v276
        %295 = vadd.xlane.f32.xlu0 %v294
        %v296 = vpop.xlane.xlu0 %295
        %v297 = vadd.f32 %v277, %v278
        %298 = vadd.xlane.f32.xlu0 %v297
        %v299 = vpop.xlane.xlu0 %298
        %v300 = vadd.f32 %v279, %v280
        %301 = vadd.xlane.f32.xlu0 %v300
        %v302 = vpop.xlane.xlu0 %301
        %v303 = vadd.f32 %v281, %v282
        %304 = vadd.xlane.f32.xlu0 %v303
        %v305 = vpop.xlane.xlu0 %304
        %v306 = vadd.f32 %v283, %v284
        %307 = vadd.xlane.f32.xlu0 %v306
        %v308 = vpop.xlane.xlu0 %307
        %v309 = vadd.f32 %v285, %v293
        %v310 = vadd.f32 %v286, %v296
        %v311 = vadd.f32 %v287, %v299
        %v312 = vadd.f32 %v288, %v302
        %v313 = vadd.f32 %v289, %v305
        %v314 = vadd.f32 %v290, %v308
        %vm315 = vcmask 7168
        %316 = vst.msk [vmem:[#allocation2] sm:$0xff] %vm315, %v309
        %317 = vst.msk [vmem:[#allocation2 + $0x8] sm:$0xff] %vm315, %v310
        %318 = vst.msk [vmem:[#allocation2 + $0x10] sm:$0xff] %vm315, %v311
        %319 = vst.msk [vmem:[#allocation2 + $0x18] sm:$0xff] %vm315, %v312
        %320 = vst.msk [vmem:[#allocation2 + $0x20] sm:$0xff] %vm315, %v313
        %321 = vst.msk [vmem:[#allocation2 + $0x28] sm:$0xff] %vm315, %v314
        // Predicated region
        $region49: #{tpu_custom_call.1} parent=39 // pred_check
          %p322 = pneg %p262
        $region50: #{tpu_custom_call.1} parent=39 // pred_check_branch
          %324 = sbr.rel (%p322) target = $region52
        $region51: #{tpu_custom_call.1} parent=39 // pred_region
          %v325 = vld [vmem:[#allocation2] sm:$0xff]
          %v326 = vld [vmem:[#allocation2 + $0x8] sm:$0xff]
          %v327 = vld [vmem:[#allocation2 + $0x10] sm:$0xff]
          %v328 = vld [vmem:[#allocation2 + $0x18] sm:$0xff]
          %v329 = vld [vmem:[#allocation2 + $0x20] sm:$0xff]
          %v330 = vld [vmem:[#allocation2 + $0x28] sm:$0xff]
          %v331 = vld [vmem:[%s1] sm:$0xff]
          %v332 = vld [vmem:[%s2] sm:$0xff]
          %vm333 = vcmask 392192
          %v335 = vsel %vm333, %v331, 0
          %337 = vmatprep.subr.mxu0 0.0
          %338 = vmatpush1.msra.mxu0 0.0
          %339 = vmatprep.subr.mxu0 0.0
          %340 = vmatpush1.msra.mxu0 0.0
          %341 = vmatprep.subr.mxu0 0.0
          %342 = vmatpush1.msra.mxu0 0.0
          %343 = vmatprep.subr.mxu0 0.0
          %344 = vmatpush1.msra.mxu0 0.0
          %345 = vmatprep.subr.mxu0 0.0
          %346 = vmatpush1.msra.mxu0 0.0
          %347 = vmatprep.subr.mxu0 0.0
          %348 = vmatpush1.msra.mxu0 0.0
          %349 = vmatprep.subr.mxu0 0.0
          %350 = vmatpush1.msra.mxu0 0.0
          %351 = vmatprep.subr.mxu0 0.0
          %352 = vmatpush1.msra.mxu0 0.0
          %353 = vmatprep.subr.mxu0 0.0
          %354 = vmatpush1.msra.mxu0 0.0
          %355 = vmatprep.subr.mxu0 0.0
          %356 = vmatpush1.msra.mxu0 0.0
          %357 = vmatprep.subr.mxu0 0.0
          %358 = vmatpush1.msra.mxu0 %v330
          %359 = vmatprep.subr.mxu0 0.0
          %360 = vmatpush1.msra.mxu0 %v329
          %361 = vmatprep.subr.mxu0 0.0
          %362 = vmatpush1.msra.mxu0 %v328
          %363 = vmatprep.subr.mxu0 0.0
          %364 = vmatpush1.msra.mxu0 %v327
          %365 = vmatprep.subr.mxu0 0.0
          %366 = vmatpush1.msra.mxu0 %v326
          %367 = vmatprep.subr.mxu0 0.0
          %368 = vmatpush1.msra.mxu0 %v325
          %369 = vmatprep.subr.mxu0 0.0
          %370 = vmatpush2.msra.mxu0 0.0
          %371 = vmatprep.subr.mxu0 0.0
          %372 = vmatpush2.msra.mxu0 0.0
          %373 = vmatprep.subr.mxu0 0.0
          %374 = vmatpush2.msra.mxu0 0.0
          %375 = vmatprep.subr.mxu0 0.0
          %376 = vmatpush2.msra.mxu0 0.0
          %377 = vmatprep.subr.mxu0 0.0
          %378 = vmatpush2.msra.mxu0 0.0
          %379 = vmatprep.subr.mxu0 0.0
          %380 = vmatpush2.msra.mxu0 0.0
          %381 = vmatprep.subr.mxu0 0.0
          %382 = vmatpush2.msra.mxu0 0.0
          %383 = vmatprep.subr.mxu0 0.0
          %384 = vmatpush2.msra.mxu0 0.0
          %385 = vmatprep.subr.mxu0 0.0
          %386 = vmatpush2.msra.mxu0 0.0
          %387 = vmatprep.subr.mxu0 0.0
          %388 = vmatpush2.msra.mxu0 0.0
          %389 = vmatprep.subr.mxu0 0.0
          %390 = vmatpush2.msra.mxu0 0.0
          %391 = vmatprep.subr.mxu0 0.0
          %392 = vmatpush2.msra.mxu0 0.0
          %393 = vmatprep.subr.mxu0 0.0
          %394 = vmatpush2.msra.mxu0 0.0
          %395 = vmatprep.subr.mxu0 0.0
          %396 = vmatpush2.msra.mxu0 0.0
          %397 = vmatprep.subr.mxu0 0.0
          %398 = vmatpush2.msra.mxu0 0.0
          %399 = vmatprep.subr.mxu0 0.0
          %400 = vmatpush2.msra.mxu0 0.0
          %401 = vmatprep.mubr.f32.mxu0 0.0
          %402 = vmatmul.mubr.f32.gmra.mxu0 %v335
          %v403 = vpop.f32.mrf.mxu0
          %v404 = vadd.f32 %v332, %v403
          %v405 = vpop.f32.mrf.mxu0
          %406 = vdwg.mxu0
          %v407 = vmax.f32 %v404, 0.0
          %v408 = vld [vmem:[%s3] sm:$0xff]
          %v409 = vld [vmem:[%s3 + $0x8] sm:$0xff]
          %v410 = vld [vmem:[%s3 + $0x10] sm:$0xff]
          %v411 = vld [vmem:[%s3 + $0x18] sm:$0xff]
          %v412 = vld [vmem:[%s3 + $0x20] sm:$0xff]
          %v413 = vld [vmem:[%s3 + $0x28] sm:$0xff]
          %v414 = vld [vmem:[%s4] sm:$0xff]
          %v415 = vld [vmem:[%s4 + $0x8] sm:$0xff]
          %v416 = vld [vmem:[%s4 + $0x10] sm:$0xff]
          %v417 = vld [vmem:[%s4 + $0x18] sm:$0xff]
          %v418 = vld [vmem:[%s4 + $0x20] sm:$0xff]
          %v419 = vld [vmem:[%s4 + $0x28] sm:$0xff]
          %vm420 = vcmask 64512
          %v422 = vsel %vm420, %v408, 0
          %v425 = vsel %vm420, %v409, 0
          %v428 = vsel %vm420, %v410, 0
          %v431 = vsel %vm420, %v411, 0
          %v434 = vsel %vm420, %v412, 0
          %v437 = vsel %vm420, %v413, 0
          %439 = vmatprep.subr.mxu0 0.0
          %440 = vmatpush1.msra.mxu0 0.0
          %441 = vmatprep.subr.mxu0 0.0
          %442 = vmatpush1.msra.mxu0 0.0
          %443 = vmatprep.subr.mxu0 0.0
          %444 = vmatpush1.msra.mxu0 0.0
          %445 = vmatprep.subr.mxu0 0.0
          %446 = vmatpush1.msra.mxu0 0.0
          %447 = vmatprep.subr.mxu0 0.0
          %448 = vmatpush1.msra.mxu0 0.0
          %449 = vmatprep.subr.mxu0 0.0
          %450 = vmatpush1.msra.mxu0 0.0
          %451 = vmatprep.subr.mxu0 0.0
          %452 = vmatpush1.msra.mxu0 0.0
          %453 = vmatprep.subr.mxu0 0.0
          %454 = vmatpush1.msra.mxu0 0.0
          %455 = vmatprep.subr.mxu0 0.0
          %456 = vmatpush1.msra.mxu0 0.0
          %457 = vmatprep.subr.mxu0 0.0
          %458 = vmatpush1.msra.mxu0 0.0
          %459 = vmatprep.subr.mxu0 0.0
          %460 = vmatpush1.msra.mxu0 0.0
          %461 = vmatprep.subr.mxu0 0.0
          %462 = vmatpush1.msra.mxu0 0.0
          %463 = vmatprep.subr.mxu0 0.0
          %464 = vmatpush1.msra.mxu0 0.0
          %465 = vmatprep.subr.mxu0 0.0
          %466 = vmatpush1.msra.mxu0 0.0
          %467 = vmatprep.subr.mxu0 0.0
          %468 = vmatpush1.msra.mxu0 0.0
          %469 = vmatprep.subr.mxu0 0.0
          %470 = vmatpush1.msra.mxu0 %v407
          %471 = vmatprep.subr.mxu0 0.0
          %472 = vmatpush2.msra.mxu0 0.0
          %473 = vmatprep.subr.mxu0 0.0
          %474 = vmatpush2.msra.mxu0 0.0
          %475 = vmatprep.subr.mxu0 0.0
          %476 = vmatpush2.msra.mxu0 0.0
          %477 = vmatprep.subr.mxu0 0.0
          %478 = vmatpush2.msra.mxu0 0.0
          %479 = vmatprep.subr.mxu0 0.0
          %480 = vmatpush2.msra.mxu0 0.0
          %481 = vmatprep.subr.mxu0 0.0
          %482 = vmatpush2.msra.mxu0 0.0
          %483 = vmatprep.subr.mxu0 0.0
          %484 = vmatpush2.msra.mxu0 0.0
          %485 = vmatprep.subr.mxu0 0.0
          %486 = vmatpush2.msra.mxu0 0.0
          %487 = vmatprep.subr.mxu0 0.0
          %488 = vmatpush2.msra.mxu0 0.0
          %489 = vmatprep.subr.mxu0 0.0
          %490 = vmatpush2.msra.mxu0 0.0
          %491 = vmatprep.subr.mxu0 0.0
          %492 = vmatpush2.msra.mxu0 0.0
          %493 = vmatprep.subr.mxu0 0.0
          %494 = vmatpush2.msra.mxu0 0.0
          %495 = vmatprep.subr.mxu0 0.0
          %496 = vmatpush2.msra.mxu0 0.0
          %497 = vmatprep.subr.mxu0 0.0
          %498 = vmatpush2.msra.mxu0 0.0
          %499 = vmatprep.subr.mxu0 0.0
          %500 = vmatpush2.msra.mxu0 0.0
          %501 = vmatprep.subr.mxu0 0.0
          %502 = vmatpush2.msra.mxu0 0.0
          %503 = vmatprep.mubr.f32.mxu0 0.0
          %504 = vmatmul.mubr.f32.gmra.mxu0 %v422
          %v505 = vpop.f32.mrf.mxu0
          %v506 = vadd.f32 %v414, %v505
          %v507 = vpop.f32.mrf.mxu0
          %508 = vmatprep.mubr.f32.mxu0 0.0
          %509 = vmatmul.mubr.f32.gmra.mxu0 %v425
          %v510 = vpop.f32.mrf.mxu0
          %v511 = vadd.f32 %v415, %v510
          %v512 = vpop.f32.mrf.mxu0
          %513 = vmatprep.mubr.f32.mxu0 0.0
          %514 = vmatmul.mubr.f32.gmra.mxu0 %v428
          %v515 = vpop.f32.mrf.mxu0
          %v516 = vadd.f32 %v416, %v515
          %v517 = vpop.f32.mrf.mxu0
          %518 = vmatprep.mubr.f32.mxu0 0.0
          %519 = vmatmul.mubr.f32.gmra.mxu0 %v431
          %v520 = vpop.f32.mrf.mxu0
          %v521 = vadd.f32 %v417, %v520
          %v522 = vpop.f32.mrf.mxu0
          %523 = vmatprep.mubr.f32.mxu0 0.0
          %524 = vmatmul.mubr.f32.gmra.mxu0 %v434
          %v525 = vpop.f32.mrf.mxu0
          %v526 = vadd.f32 %v418, %v525
          %v527 = vpop.f32.mrf.mxu0
          %528 = vmatprep.mubr.f32.mxu0 0.0
          %529 = vmatmul.mubr.f32.gmra.mxu0 %v437
          %v530 = vpop.f32.mrf.mxu0
          %v531 = vadd.f32 %v419, %v530
          %v532 = vpop.f32.mrf.mxu0
          %533 = vdwg.mxu0
          %v534 = vxor.u32 %v506, 2147483648
          %v535 = vxor.u32 %v511, 2147483648
          %v536 = vxor.u32 %v516, 2147483648
          %v537 = vxor.u32 %v521, 2147483648
          %v538 = vxor.u32 %v526, 2147483648
          %v539 = vxor.u32 %v531, 2147483648
          %v540 = vmul.f32 %v534, 1.442695
          %v541 = vpow.pop %v540
          %v542 = vmul.f32 %v535, 1.442695
          %v543 = vpow.pop %v542
          %v544 = vmul.f32 %v536, 1.442695
          %v545 = vpow.pop %v544
          %v546 = vmul.f32 %v537, 1.442695
          %v547 = vpow.pop %v546
          %v548 = vmul.f32 %v538, 1.442695
          %v549 = vpow.pop %v548
          %v550 = vmul.f32 %v539, 1.442695
          %v551 = vpow.pop %v550
          %v552 = vadd.f32 %v541, 1.0
          %v553 = vadd.f32 %v543, 1.0
          %v554 = vadd.f32 %v545, 1.0
          %v555 = vadd.f32 %v547, 1.0
          %v556 = vadd.f32 %v549, 1.0
          %v557 = vadd.f32 %v551, 1.0
          %v558 = vrcp.pop %v552
          %v559 = vmul.f32 1.0, %v558
          %v560 = vrcp.pop %v553
          %v561 = vmul.f32 1.0, %v560
          %v562 = vrcp.pop %v554
          %v563 = vmul.f32 1.0, %v562
          %v564 = vrcp.pop %v555
          %v565 = vmul.f32 1.0, %v564
          %v566 = vrcp.pop %v556
          %v567 = vmul.f32 1.0, %v566
          %v568 = vrcp.pop %v557
          %v569 = vmul.f32 1.0, %v568
          %570 = vst.msk [vmem:[%s261] sm:$0xff] %vm315, %v559
          %571 = vst.msk [vmem:[%s261 + $0x8] sm:$0xff] %vm315, %v561
          %572 = vst.msk [vmem:[%s261 + $0x10] sm:$0xff] %vm315, %v563
          %573 = vst.msk [vmem:[%s261 + $0x18] sm:$0xff] %vm315, %v565
          %574 = vst.msk [vmem:[%s261 + $0x20] sm:$0xff] %vm315, %v567
          %575 = vst.msk [vmem:[%s261 + $0x28] sm:$0xff] %vm315, %v569
        $region52: #{tpu_custom_call.1} parent=39 // pred_fallthru
          _
        %p576 = scmp.lt.s32.totalorder %s23, 1
        %s577 = scalar_select %p576, %s23, 1
        %s578 = smul.addr %s577, 6
        %s579 = smul.addr %s578, 8
        %s580 = scalar_lea.vmem %s5, %s579
        // Predicated region
        $region53: #{tpu_custom_call.1} parent=39 // pred_check
          %p581 = pneg %p161
        $region54: #{tpu_custom_call.1} parent=39 // pred_check_branch
          %583 = sbr.rel (%p581) target = $region56
        $region55: #{tpu_custom_call.1} parent=39 // pred_region
          _
        $region56: #{tpu_custom_call.1} parent=39 // pred_fallthru
          _
      $region40: #{tpu_custom_call.1} parent=5 // pred_fallthru
        _
      %p584 = scmp.le.s32.totalorder 2, %s14
      // Predicated region
      $region57: #{tpu_custom_call.1} parent=5 // pred_check
        %p585 = pneg %p584
      $region58: #{tpu_custom_call.1} parent=5 // pred_check_branch
        %587 = sbr.rel (%p585) target = $region60
      $region59: #{tpu_custom_call.1} parent=5 // pred_region
        %s588 = ssub.s32 %s14, 2
        // Predicated region
        $region61: #{tpu_custom_call.1} parent=59 // pred_check
          %p589 = pneg %p167
        $region62: #{tpu_custom_call.1} parent=59 // pred_check_branch
          %591 = sbr.rel (%p589) target = $region64
        $region63: #{tpu_custom_call.1} parent=59 // pred_region
          %p592 = scmp.lt.s32.totalorder %s25, 1
          %s593 = scalar_select %p592, %s25, 1
          %s594 = smul.addr %s593, 6
          %s595 = smul.addr %s594, 8
          %s596 = scalar_lea.vmem %s5, %s595
        $region64: #{tpu_custom_call.1} parent=59 // pred_fallthru
          _
      $region60: #{tpu_custom_call.1} parent=5 // pred_fallthru
        _
    $region6: #{tpu_custom_call.1} parent=1 // loop_footer
      %s18 = sadd.s32 1, %s14
    $region7: #{tpu_custom_call.1} parent=1 // loop_footer_branch
      %13 = sbr.rel target = $region3
    $region8: #{tpu_custom_call.1} parent=1 // loop_exit
      _
    %597 = vsyncpa [#allocation4], 1
    %s598 = scalar_lea.sflag [#allocation4], 1
    %599 = vsyncpa %s598, 1

</llo_original>
